<compile_context>
chip_gen: v7x
topology: tpu7x:2x2x1
jax: 0.10.0
libtpu: 0.0.40
codegen_flags: <defaults>
</compile_context>

<pallas_src>
import jax
import jax.numpy as jnp
from jax import lax
from jax.experimental import pallas as pl
from jax.experimental.pallas import tpu as pltpu


def _round_up(a, b):
    return (a + b - 1) // b * b


def _cheb_kernel(cheb_ref, sat_ref, y_ref, o_ref, acc_ref):
    """One grid point = (batch b, output-row tile i).

    cheb_ref : (K, N_pad, tn)        Chebyshev polynomials, column tile i (batch-invariant)
    sat_ref  : (1, N_pad, tn)        spatial attention for batch b, column tile i
    y_ref    : (1, K, N_pad, F_out*T) Theta-premultiplied signal for batch b (tile-invariant)
    o_ref    : (1, tn, F_out*T)      output rows for (b, i)
    acc_ref  : (tn, F_out*T) f32     VMEM scratch accumulator
    """
    K = cheb_ref.shape[0]
    sat = sat_ref[0]                                    # (N_pad, tn), bf16, VPU

    # K is small and static -> unrolled Python loop; matmuls accumulate in-place (MRB on v7x).
    for k in range(K):
        a_k = cheb_ref[k] * sat                         # attention-weighted polynomial (N_pad, tn)
        # contrib[i, c] = sum_j a_k[j, i] * y[b, k, j, c]   (transpose folded into the MXU operand)
        contrib = lax.dot_general(
            a_k, y_ref[0, k],
            dimension_numbers=(((0,), (0,)), ((), ())),
            preferred_element_type=jnp.float32)          # (tn, F_out*T) f32
        if k == 0:
            acc_ref[...] = contrib
        else:
            acc_ref[...] += contrib

    o_ref[0] = jnp.maximum(acc_ref[...], 0.0).astype(o_ref.dtype)


def cheb_conv_with_sat(x_bnft, spatial_attention, cheb_polys, theta, *,
                       compute_dtype=jnp.bfloat16, tile_n=128):
    """
    x_bnft            : (B, N, F_in, T)   -- PyTorch layout
    spatial_attention : (B, N, N)
    cheb_polys        : (K, N, N)
    theta             : (K, F_in, F_out)
    returns           : (B, N, F_out, T)  -- PyTorch layout
    """
    B, N, F_in, T = x_bnft.shape
    K = cheb_polys.shape[0]
    F_out = theta.shape[2]
    FoT = F_out * T
    out_dtype = x_bnft.dtype

    # --- Theta contraction hoisted to the wrapper: one fat XLA GEMM (no Kronecker W). ---
    # y[b,k,n,o,t] = sum_f x[b,n,f,t] * theta[k,f,o]; (o,t) flattened contiguously into lanes.
    y = jnp.einsum('bnft,kfo->bknot',
                   x_bnft.astype(compute_dtype), theta.astype(compute_dtype),
                   preferred_element_type=jnp.float32)
    y = y.reshape(B, K, N, FoT).astype(compute_dtype)

    # --- Pad N once so the output-row tiling is (8,128)-friendly. ---
    if N >= tile_n:
        tn = tile_n
        n_pad = _round_up(N, tn)
    else:
        tn = n_pad = _round_up(N, 8)
    if n_pad != N:
        p = n_pad - N
        y = jnp.pad(y, ((0, 0), (0, 0), (0, p), (0, 0)))
        sat_p = jnp.pad(spatial_attention, ((0, 0), (0, p), (0, p)))
        cheb_p = jnp.pad(cheb_polys, ((0, 0), (0, p), (0, p)))
    else:
        sat_p = spatial_attention
        cheb_p = cheb_polys
    sat_p = sat_p.astype(compute_dtype)
    cheb_p = cheb_p.astype(compute_dtype)

    n_tiles = n_pad // tn
    bpe = jnp.dtype(compute_dtype).itemsize
    obpe = jnp.dtype(out_dtype).itemsize

    # Explicit scoped-VMEM budget (2x for double buffering) + headroom; v5e's ~16 MiB default
    # is otherwise too small for real ASTGCN shapes.
    blk_bytes = (K * n_pad * tn * bpe          # cheb tile
                 + n_pad * tn * bpe            # sat tile
                 + K * n_pad * FoT * bpe       # y tile
                 + tn * FoT * obpe)            # out tile
    acc_bytes = tn * FoT * 4
    vmem_limit_bytes = min(100 * 1024 * 1024, int(2 * blk_bytes + acc_bytes + (8 << 20)))

    out2 = pl.pallas_call(
        _cheb_kernel,
        out_shape=jax.ShapeDtypeStruct((B, n_pad, FoT), out_dtype),
        grid_spec=pltpu.PrefetchScalarGridSpec(
            num_scalar_prefetch=0,
            grid=(B, n_tiles),
            in_specs=[
                # Chebyshev polynomials: column tile i (same block for every batch).
                pl.BlockSpec((K, n_pad, tn), lambda b, i: (0, 0, i)),
                # Spatial attention: batch b, column tile i.
                pl.BlockSpec((1, n_pad, tn), lambda b, i: (b, 0, i)),
                # Theta-premultiplied signal: full block for batch b (invariant across i).
                pl.BlockSpec((1, K, n_pad, FoT), lambda b, i: (b, 0, 0, 0)),
            ],
            out_specs=pl.BlockSpec((1, tn, FoT), lambda b, i: (b, i, 0)),
            scratch_shapes=[pltpu.VMEM((tn, FoT), jnp.float32)],
        ),
        compiler_params=pltpu.CompilerParams(
            dimension_semantics=("parallel", "parallel"),
            vmem_limit_bytes=vmem_limit_bytes),
    )(cheb_p, sat_p, y)

    # Drop row padding; free reshape back to the PyTorch layout (B, N, F_out, T).
    return out2[:, :N, :].reshape(B, N, F_out, T)


def _reference(x_bnft, spatial_attention, cheb_polys, theta):
    """Pure-JAX f32 reference mirroring the PyTorch forward."""
    tkat = cheb_polys[None, :, :, :] * spatial_attention[:, None, :, :]     # (B,K,N,N)
    rhs = jnp.einsum('bkji,bjft->bkift', tkat, x_bnft)                      # (B,K,N,F_in,T)
    out = jnp.einsum('bkift,kfo->biot', rhs, theta)                         # (B,N,F_out,T)
    return jax.nn.relu(out)


if __name__ == "__main__":
    # Small shapes consistent with the module: x = (B, N, F_in, T)
    B, N, F_in, F_out, T, K = 2, 16, 4, 32, 8, 3

    key = jax.random.PRNGKey(0)
    k1, k2, k3, k4 = jax.random.split(key, 4)

    x = jax.random.normal(k1, (B, N, F_in, T), dtype=jnp.float32)
    spatial_attention = jax.random.uniform(k2, (B, N, N), dtype=jnp.float32)
    cheb_polys = jax.random.normal(k3, (K, N, N), dtype=jnp.float32)
    # Theta params (deterministic init; PyTorch's are uninitialized FloatTensors).
    theta = jax.random.normal(k4, (K, F_in, F_out), dtype=jnp.float32) * 0.1

    out = cheb_conv_with_sat(x, spatial_attention, cheb_polys, theta)
    out = jax.block_until_ready(out)

    ref = _reference(x, spatial_attention, cheb_polys, theta)
    assert out.shape == (B, N, F_out, T)
    # bf16 MXU operands with f32 accumulation -> bf16-level tolerance.
    assert jnp.allclose(out, ref, atol=5e-2, rtol=5e-2), float(jnp.max(jnp.abs(out - ref)))

    print("KERNEL_OK")
</pallas_src>

<mosaic_0001>
module attributes {stable_mosaic.version = 11 : i64} {
  func.func @_cheb_kernel(%arg0: i32, %arg1: i32, %arg2: memref<3x16x16xbf16, #tpu.memory_space<vmem>>, %arg3: memref<1x16x16xbf16, #tpu.memory_space<vmem>>, %arg4: memref<1x3x16x256xbf16, #tpu.memory_space<vmem>>, %arg5: memref<1x16x256xf32, #tpu.memory_space<vmem>>, %arg6: memref<16x256xf32, #tpu.memory_space<vmem>>) attributes {dimension_semantics = [#tpu.dimension_semantics<parallel>, #tpu.dimension_semantics<parallel>], iteration_bounds = array<i64: 2, 1>, scalar_prefetch = 0 : i64, scratch_operands = 1 : i64, tpu.core_type = #tpu.core_type<tc>, window_params = [{transform_indices = @transform_0, window_bounds = array<i64: 3, 16, 16>}, {transform_indices = @transform_1, window_bounds = array<i64: 1, 16, 16>}, {transform_indices = @transform_2, window_bounds = array<i64: 1, 3, 16, 256>}, {transform_indices = @transform_3, window_bounds = array<i64: 1, 16, 256>}]} {
    %c0 = arith.constant 0 : index
    %c0_0 = arith.constant 0 : index
    %c0_1 = arith.constant 0 : index
    %0 = vector.load %arg3[%c0, %c0_0, %c0_1] : memref<1x16x16xbf16, #tpu.memory_space<vmem>>, vector<1x16x16xbf16>
    %1 = vector.shape_cast %0 : vector<1x16x16xbf16> to vector<16x16xbf16>
    %c0_2 = arith.constant 0 : index
    %c0_3 = arith.constant 0 : index
    %c0_4 = arith.constant 0 : index
    %2 = vector.load %arg2[%c0_2, %c0_3, %c0_4] : memref<3x16x16xbf16, #tpu.memory_space<vmem>>, vector<1x16x16xbf16>
    %3 = vector.shape_cast %2 : vector<1x16x16xbf16> to vector<16x16xbf16>
    %4 = arith.mulf %3, %1 : vector<16x16xbf16>
    %c0_5 = arith.constant 0 : index
    %c0_6 = arith.constant 0 : index
    %c0_7 = arith.constant 0 : index
    %c0_8 = arith.constant 0 : index
    %5 = vector.load %arg4[%c0_5, %c0_6, %c0_7, %c0_8] : memref<1x3x16x256xbf16, #tpu.memory_space<vmem>>, vector<1x1x16x256xbf16>
    %6 = vector.shape_cast %5 : vector<1x1x16x256xbf16> to vector<16x256xbf16>
    %cst = arith.constant dense<0.000000e+00> : vector<16x256xf32>
    %7 = tpu.matmul %4, %6, %cst {dimension_numbers = #tpu.dot_dimension_numbers<[0], [0], [1], [1], [0, 1, 1, 1], [], []>} : vector<16x16xbf16>, vector<16x256xbf16>, vector<16x256xf32> -> vector<16x256xf32>
    %c0_9 = arith.constant 0 : index
    %c0_10 = arith.constant 0 : index
    %8 = vector.load %arg6[%c0_9, %c0_10] : memref<16x256xf32, #tpu.memory_space<vmem>>, vector<16x256xf32>
    tpu.vector_store %arg6[%c0_9, %c0_10], %7 {strides = array<i32>} : memref<16x256xf32, #tpu.memory_space<vmem>>, vector<16x256xf32>,
    %c1 = arith.constant 1 : index
    %c0_11 = arith.constant 0 : index
    %c0_12 = arith.constant 0 : index
    %9 = vector.load %arg2[%c1, %c0_11, %c0_12] : memref<3x16x16xbf16, #tpu.memory_space<vmem>>, vector<1x16x16xbf16>
    %10 = vector.shape_cast %9 : vector<1x16x16xbf16> to vector<16x16xbf16>
    %11 = arith.mulf %10, %1 : vector<16x16xbf16>
    %c0_13 = arith.constant 0 : index
    %c1_14 = arith.constant 1 : index
    %c0_15 = arith.constant 0 : index
    %c0_16 = arith.constant 0 : index
    %12 = vector.load %arg4[%c0_13, %c1_14, %c0_15, %c0_16] : memref<1x3x16x256xbf16, #tpu.memory_space<vmem>>, vector<1x1x16x256xbf16>
    %13 = vector.shape_cast %12 : vector<1x1x16x256xbf16> to vector<16x256xbf16>
    %cst_17 = arith.constant dense<0.000000e+00> : vector<16x256xf32>
    %14 = tpu.matmul %11, %13, %cst_17 {dimension_numbers = #tpu.dot_dimension_numbers<[0], [0], [1], [1], [0, 1, 1, 1], [], []>} : vector<16x16xbf16>, vector<16x256xbf16>, vector<16x256xf32> -> vector<16x256xf32>
    %c0_18 = arith.constant 0 : index
    %c0_19 = arith.constant 0 : index
    %15 = vector.load %arg6[%c0_18, %c0_19] : memref<16x256xf32, #tpu.memory_space<vmem>>, vector<16x256xf32>
    %16 = arith.addf %15, %14 : vector<16x256xf32>
    %c0_20 = arith.constant 0 : index
    %c0_21 = arith.constant 0 : index
    %17 = vector.load %arg6[%c0_20, %c0_21] : memref<16x256xf32, #tpu.memory_space<vmem>>, vector<16x256xf32>
    tpu.vector_store %arg6[%c0_20, %c0_21], %16 {strides = array<i32>} : memref<16x256xf32, #tpu.memory_space<vmem>>, vector<16x256xf32>,
    %c2 = arith.constant 2 : index
    %c0_22 = arith.constant 0 : index
    %c0_23 = arith.constant 0 : index
    %18 = vector.load %arg2[%c2, %c0_22, %c0_23] : memref<3x16x16xbf16, #tpu.memory_space<vmem>>, vector<1x16x16xbf16>
    %19 = vector.shape_cast %18 : vector<1x16x16xbf16> to vector<16x16xbf16>
    %20 = arith.mulf %19, %1 : vector<16x16xbf16>
    %c0_24 = arith.constant 0 : index
    %c2_25 = arith.constant 2 : index
    %c0_26 = arith.constant 0 : index
    %c0_27 = arith.constant 0 : index
    %21 = vector.load %arg4[%c0_24, %c2_25, %c0_26, %c0_27] : memref<1x3x16x256xbf16, #tpu.memory_space<vmem>>, vector<1x1x16x256xbf16>
    %22 = vector.shape_cast %21 : vector<1x1x16x256xbf16> to vector<16x256xbf16>
    %cst_28 = arith.constant dense<0.000000e+00> : vector<16x256xf32>
    %23 = tpu.matmul %20, %22, %cst_28 {dimension_numbers = #tpu.dot_dimension_numbers<[0], [0], [1], [1], [0, 1, 1, 1], [], []>} : vector<16x16xbf16>, vector<16x256xbf16>, vector<16x256xf32> -> vector<16x256xf32>
    %c0_29 = arith.constant 0 : index
    %c0_30 = arith.constant 0 : index
    %24 = vector.load %arg6[%c0_29, %c0_30] : memref<16x256xf32, #tpu.memory_space<vmem>>, vector<16x256xf32>
    %25 = arith.addf %24, %23 : vector<16x256xf32>
    %c0_31 = arith.constant 0 : index
    %c0_32 = arith.constant 0 : index
    %26 = vector.load %arg6[%c0_31, %c0_32] : memref<16x256xf32, #tpu.memory_space<vmem>>, vector<16x256xf32>
    tpu.vector_store %arg6[%c0_31, %c0_32], %25 {strides = array<i32>} : memref<16x256xf32, #tpu.memory_space<vmem>>, vector<16x256xf32>,
    %c0_33 = arith.constant 0 : index
    %c0_34 = arith.constant 0 : index
    %27 = vector.load %arg6[%c0_33, %c0_34] : memref<16x256xf32, #tpu.memory_space<vmem>>, vector<16x256xf32>
    %cst_35 = arith.constant 0.000000e+00 : f32
    %28 = vector.broadcast %cst_35 : f32 to vector<16x256xf32>
    %29 = arith.maximumf %27, %28 : vector<16x256xf32>
    %c0_36 = arith.constant 0 : index
    %c0_37 = arith.constant 0 : index
    %c0_38 = arith.constant 0 : index
    %30 = vector.load %arg5[%c0_36, %c0_37, %c0_38] : memref<1x16x256xf32, #tpu.memory_space<vmem>>, vector<1x16x256xf32>
    %31 = vector.shape_cast %30 : vector<1x16x256xf32> to vector<16x256xf32>
    %32 = vector.shape_cast %29 : vector<16x256xf32> to vector<1x16x256xf32>
    tpu.vector_store %arg5[%c0_36, %c0_37, %c0_38], %32 {strides = array<i32>} : memref<1x16x256xf32, #tpu.memory_space<vmem>>, vector<1x16x256xf32>,
    return
  }
  func.func @transform_0(%arg0: i32, %arg1: i32) -> (i32, i32, i32) {
    %c0_i32 = arith.constant 0 : i32
    %c0_i32_0 = arith.constant 0 : i32
    %c0_i32_1 = arith.constant 0 : i32
    return %c0_i32, %c0_i32_0, %arg1 : i32, i32, i32
  }
  func.func @transform_1(%arg0: i32, %arg1: i32) -> (i32, i32, i32) {
    %c0_i32 = arith.constant 0 : i32
    %c0_i32_0 = arith.constant 0 : i32
    return %arg0, %c0_i32, %arg1 : i32, i32, i32
  }
  func.func @transform_2(%arg0: i32, %arg1: i32) -> (i32, i32, i32, i32) {
    %c0_i32 = arith.constant 0 : i32
    %c0_i32_0 = arith.constant 0 : i32
    %c0_i32_1 = arith.constant 0 : i32
    %c0_i32_2 = arith.constant 0 : i32
    return %arg0, %c0_i32, %c0_i32_0, %c0_i32_1 : i32, i32, i32, i32
  }
  func.func @transform_3(%arg0: i32, %arg1: i32) -> (i32, i32, i32) {
    %c0_i32 = arith.constant 0 : i32
    %c0_i32_0 = arith.constant 0 : i32
    return %arg0, %arg1, %c0_i32 : i32, i32, i32
  }
}

</mosaic_0001>

<llo_original>
// kernel: tpu_custom_call.1
$region0: #{tpu_custom_call.1}
  #allocation0 [shape = 'u32[]', space=smem, size = 0x4, offset = 0x4, fixed_abs, tag = 'smem constant byte address 0x4 - core index']
  #allocation1 [shape = 'u32[144,128]{1,0:T(1,128)}', space=vmem, size = 0x12000, scoped, tag = 'internal scratch']
  #allocation2 [shape = 'f32[16,256]{1,0:T(8,128)}', space=vmem, size = 0x4000, scoped, tag = 'scratch operand']
  %s0 = inlined_call_operand.hbm [shape: bf16[3,16,16], index: 0, kind: input, shape index: {}]
  %s1 = inlined_call_operand.hbm [shape: bf16[2,16,16], index: 1, kind: input, shape index: {}]
  %s2 = inlined_call_operand.hbm [shape: bf16[2,3,16,256], index: 2, kind: input, shape index: {}]
  %s3 = inlined_call_operand.hbm [shape: f32[2,16,256], index: 3, kind: output, shape index: {}]
  %s4 = sld [smem:[#allocation0]]
  $region57: #{tpu_custom_call.1} parent=0
    _
  %s6 = ssub.s32 1, %s4
  %s7 = scalar_select 0, %s6, %s4
  $region1: #{tpu_custom_call.1} parent=0
    #allocation3 [shape = 'u8[12288]{0}', space=vmem, size = 0x3000, scoped, tag = 'input window, operand 0, single buffered']
    #allocation4 [shape = 's32[2]{0}', space=sflag, size = 0x8, scoped, tag = 'scoped memory for tpu_custom_call.1']
    #allocation5 [shape = 's32[2]{0}', space=sflag, size = 0x8, scoped, tag = 'scoped memory for tpu_custom_call.1']
    #allocation6 [shape = 'u8[8192]{0}', space=vmem, size = 0x2000, scoped, tag = 'input window, operand 1']
    #allocation7 [shape = 's32[2]{0}', space=sflag, size = 0x8, scoped, tag = 'scoped memory for tpu_custom_call.1']
    #allocation8 [shape = 'u8[49152]{0}', space=vmem, size = 0xc000, scoped, tag = 'input window, operand 2']
    #allocation9 [shape = 'u8[32768]{0}', space=vmem, size = 0x8000, scoped, tag = 'output window, operand 0']
    %8 = vsyncpa [#allocation4], 0
    %9 = vsyncpa [#allocation7], 0
    %s10 = scalar_lea.sflag [#allocation7], 1
    %11 = vsyncpa %s10, 0
    %12 = vsyncpa [#allocation5], 0
    %s13 = scalar_lea.sflag [#allocation5], 1
    %14 = vsyncpa %s13, 0
    loop: start=0, step=1, limit=4
    $region2: #{tpu_custom_call.1} parent=1 // loop_pre_header
      _
    $region3: #{tpu_custom_call.1} parent=1 // loop_header
      %s16 = sphi 0, %s20
      %p17 = scmp.ge.s32.totalorder %s16, 4
      %s23 = sphi 0, %s35
      %s24 = sphi 0, %s31
      %s25 = sphi 0, %s23
      %s26 = sphi 0, %s24
      %s27 = sphi 0, %s25
      %s28 = sphi 0, %s26
      %s38 = sphi 0, %s40
      %s41 = sphi 0, %s38
      %s42 = sphi 0, %s41
      %s58 = sphi 0, %s42
      %s66 = sphi 0, %s68
      %s69 = sphi 0, %s66
      %s70 = sphi 0, %s69
      %s86 = sphi 0, %s70
      %s92 = sphi 0, %s94
      %s95 = sphi 0, %s92
      %s96 = sphi 0, %s95
      %s112 = sphi 0, %s96
      %s120 = sphi 0, %s122
      %s123 = sphi 0, %s120
      %s124 = sphi 0, %s123
      %s140 = sphi 0, %s124
    $region4: #{tpu_custom_call.1} parent=1 // loop_header_branch
      %19 = sbr.rel (%p17) target = $region8
    $region5: #{tpu_custom_call.1} parent=1 // loop_body
      %s21 = ssub.s32 %s16, 1
      %s22 = ssub.s32 %s16, 2
      %s29 = sadd.s32 1, %s24
      %p30 = scmp.ge.s32.totalorder %s29, 1
      %s31 = scalar_select %p30, 0, %s29
      %s32 = sadd.s32 1, %s23
      %s33 = scalar_select %p30, %s32, %s23
      %p34 = scmp.ge.s32.totalorder %s33, 2
      %s35 = scalar_select %p34, 0, %s33
      %s36 = ssub.s32 %s24, %s31
      %p37 = scmp.eq.s32.totalorder %s36, 0
      %s39 = sadd.s32 %s38, 1
      %s40 = scalar_select %p37, %s38, %s39
      %p43 = pneg %p37
      %p44 = scmp.eq.s32.totalorder %s16, 1
      %p45 = por %p43, %p44
      %p46 = scmp.ne.s32.totalorder %s38, %s41
      %p47 = scmp.eq.s32.totalorder %s16, 0
      %p48 = por %p46, %p47
      %p49 = scmp.ne.s32.totalorder %s38, %s41
      %p50 = scmp.eq.s32.totalorder %s21, 1
      %p51 = por %p49, %p50
      %p52 = scmp.ne.s32.totalorder %s41, %s42
      %p53 = scmp.eq.s32.totalorder %s21, 0
      %p54 = por %p52, %p53
      %p55 = scmp.ne.s32.totalorder %s41, %s42
      %p56 = scmp.eq.s32.totalorder %s22, 1
      %p57 = por %p55, %p56
      %p59 = scmp.ne.s32.totalorder %s42, %s58
      %p60 = scmp.eq.s32.totalorder %s22, 0
      %p61 = por %p59, %p60
      %s62 = ssub.s32 %s23, %s35
      %s63 = ssub.s32 %s24, %s31
      %s64 = sor.u32 %s62, %s63
      %p65 = scmp.eq.s32.totalorder %s64, 0
      %s67 = sadd.s32 %s66, 1
      %s68 = scalar_select %p65, %s66, %s67
      %p71 = pneg %p65
      %p72 = scmp.eq.s32.totalorder %s16, 1
      %p73 = por %p71, %p72
      %p74 = scmp.ne.s32.totalorder %s66, %s69
      %p75 = scmp.eq.s32.totalorder %s16, 0
      %p76 = por %p74, %p75
      %p77 = scmp.ne.s32.totalorder %s66, %s69
      %p78 = scmp.eq.s32.totalorder %s21, 1
      %p79 = por %p77, %p78
      %p80 = scmp.ne.s32.totalorder %s69, %s70
      %p81 = scmp.eq.s32.totalorder %s21, 0
      %p82 = por %p80, %p81
      %p83 = scmp.ne.s32.totalorder %s69, %s70
      %p84 = scmp.eq.s32.totalorder %s22, 1
      %p85 = por %p83, %p84
      %p87 = scmp.ne.s32.totalorder %s70, %s86
      %p88 = scmp.eq.s32.totalorder %s22, 0
      %p89 = por %p87, %p88
      %s90 = ssub.s32 %s23, %s35
      %p91 = scmp.eq.s32.totalorder %s90, 0
      %s93 = sadd.s32 %s92, 1
      %s94 = scalar_select %p91, %s92, %s93
      %p97 = pneg %p91
      %p98 = scmp.eq.s32.totalorder %s16, 1
      %p99 = por %p97, %p98
      %p100 = scmp.ne.s32.totalorder %s92, %s95
      %p101 = scmp.eq.s32.totalorder %s16, 0
      %p102 = por %p100, %p101
      %p103 = scmp.ne.s32.totalorder %s92, %s95
      %p104 = scmp.eq.s32.totalorder %s21, 1
      %p105 = por %p103, %p104
      %p106 = scmp.ne.s32.totalorder %s95, %s96
      %p107 = scmp.eq.s32.totalorder %s21, 0
      %p108 = por %p106, %p107
      %p109 = scmp.ne.s32.totalorder %s95, %s96
      %p110 = scmp.eq.s32.totalorder %s22, 1
      %p111 = por %p109, %p110
      %p113 = scmp.ne.s32.totalorder %s96, %s112
      %p114 = scmp.eq.s32.totalorder %s22, 0
      %p115 = por %p113, %p114
      %s116 = ssub.s32 %s23, %s35
      %s117 = ssub.s32 %s24, %s31
      %s118 = sor.u32 %s116, %s117
      %p119 = scmp.eq.s32.totalorder %s118, 0
      %s121 = sadd.s32 %s120, 1
      %s122 = scalar_select %p119, %s120, %s121
      %p125 = pneg %p119
      %p126 = scmp.eq.s32.totalorder %s16, 1
      %p127 = por %p125, %p126
      %p128 = scmp.ne.s32.totalorder %s120, %s123
      %p129 = scmp.eq.s32.totalorder %s16, 0
      %p130 = por %p128, %p129
      %p131 = scmp.ne.s32.totalorder %s120, %s123
      %p132 = scmp.eq.s32.totalorder %s21, 1
      %p133 = por %p131, %p132
      %p134 = scmp.ne.s32.totalorder %s123, %s124
      %p135 = scmp.eq.s32.totalorder %s21, 0
      %p136 = por %p134, %p135
      %p137 = scmp.ne.s32.totalorder %s123, %s124
      %p138 = scmp.eq.s32.totalorder %s22, 1
      %p139 = por %p137, %p138
      %p141 = scmp.ne.s32.totalorder %s124, %s140
      %p142 = scmp.eq.s32.totalorder %s22, 0
      %p143 = por %p141, %p142
      %p144 = scmp.le.s32.totalorder 1, %s16
      %p145 = scmp.lt.s32.totalorder %s16, 3
      %p146 = pnand %p144, %p145
      %p147 = pneg %p146
      // Predicated region
      $region9: #{tpu_custom_call.1} parent=5 // pred_check
        _
      $region10: #{tpu_custom_call.1} parent=5 // pred_check_branch
        %149 = sbr.rel (%p146) target = $region12
      $region11: #{tpu_custom_call.1} parent=5 // pred_region
        %s150 = ssub.s32 %s16, 1
        // Predicated region
        $region13: #{tpu_custom_call.1} parent=11 // pred_check
          %p151 = pneg %p54
        $region14: #{tpu_custom_call.1} parent=11 // pred_check_branch
          %153 = sbr.rel (%p151) target = $region16
        $region15: #{tpu_custom_call.1} parent=11 // pred_region
          %s155 = ssub.s32 384, 384
          %156 = vsyncadd [#allocation4], %s155
          %s157 = smul.addr %s26, 64
          %s158 = scalar_lea.hbm %s0, %s157
          %s159 = sshll.u32 [#allocation3], 4
          %s160 = int_to_ptr.vmem [resolvable:$true] %s159
          %165 = dma.hbm_to_vmem [thread:$0]  %s158, 384, %s160, [#allocation4], 64, 64, 4
        $region16: #{tpu_custom_call.1} parent=11 // pred_fallthru
          _
      $region12: #{tpu_custom_call.1} parent=5 // pred_fallthru
        _
      %p166 = scmp.lt.s32.totalorder %s16, 2
      // Predicated region
      $region17: #{tpu_custom_call.1} parent=5 // pred_check
        %p167 = pneg %p166
      $region18: #{tpu_custom_call.1} parent=5 // pred_check_branch
        %169 = sbr.rel (%p167) target = $region20
      $region19: #{tpu_custom_call.1} parent=5 // pred_region
        // Predicated region
        $region21: #{tpu_custom_call.1} parent=19 // pred_check
          %p170 = pneg %p76
        $region22: #{tpu_custom_call.1} parent=19 // pred_check_branch
          %172 = sbr.rel (%p170) target = $region24
        $region23: #{tpu_custom_call.1} parent=19 // pred_region
          %s173 = sand.u32 %s16, 1
          %s174 = scalar_lea.sflag [#allocation7], %s173
          %s175 = sand.u32 %s66, 1
          %s176 = smul.addr %s175, 8
          %s177 = scalar_lea.vmem [#allocation6], %s176
          %s179 = ssub.s32 128, 128
          %180 = vsyncadd %s174, %s179
          %s181 = smul.addr %s23, 2
          %s182 = sadd.s32 %s24, %s181
          %s183 = smul.addr %s182, 64
          %s184 = scalar_lea.hbm %s1, %s183
          %s185 = sshll.u32 %s177, 4
          %s186 = int_to_ptr.vmem [resolvable:$true] %s185
          %191 = dma.hbm_to_vmem [thread:$0]  %s184, 128, %s186, %s174, 64, 64, 4
        $region24: #{tpu_custom_call.1} parent=19 // pred_fallthru
          _
        // Predicated region
        $region25: #{tpu_custom_call.1} parent=19 // pred_check
          %p192 = pneg %p102
        $region26: #{tpu_custom_call.1} parent=19 // pred_check_branch
          %194 = sbr.rel (%p192) target = $region28
        $region27: #{tpu_custom_call.1} parent=19 // pred_region
          %s195 = sand.u32 %s16, 1
          %s196 = scalar_lea.sflag [#allocation7], %s195
          %s197 = sand.u32 %s92, 1
          %s198 = smul.addr %s197, 48
          %s199 = scalar_lea.vmem [#allocation8], %s198
          %s201 = ssub.s32 768, 768
          %202 = vsyncadd %s196, %s201
          %s203 = smul.addr %s23, 12
          %s204 = smul.addr %s203, 64
          %s205 = scalar_lea.hbm %s2, %s204
          %s206 = sshll.u32 %s199, 4
          %s207 = int_to_ptr.vmem [resolvable:$true] %s206
          %212 = dma.hbm_to_vmem [thread:$0]  %s205, 768, %s207, %s196, 128, 128, 8
        $region28: #{tpu_custom_call.1} parent=19 // pred_fallthru
          _
      $region20: #{tpu_custom_call.1} parent=5 // pred_fallthru
        _
      %p213 = scmp.le.s32.totalorder 1, %s16
      %p214 = scmp.lt.s32.totalorder %s16, 3
      %p215 = pnand %p213, %p214
      %p216 = pneg %p215
      // Predicated region
      $region29: #{tpu_custom_call.1} parent=5 // pred_check
        _
      $region30: #{tpu_custom_call.1} parent=5 // pred_check_branch
        %218 = sbr.rel (%p215) target = $region32
      $region31: #{tpu_custom_call.1} parent=5 // pred_region
        %s219 = ssub.s32 %s16, 1
        // Predicated region
        $region33: #{tpu_custom_call.1} parent=31 // pred_check
          %p220 = pneg %p54
        $region34: #{tpu_custom_call.1} parent=31 // pred_check_branch
          %222 = sbr.rel (%p220) target = $region36
        $region35: #{tpu_custom_call.1} parent=31 // pred_region
          %223 = dma.done [#allocation4], 384
        $region36: #{tpu_custom_call.1} parent=31 // pred_fallthru
          _
        %s224 = sand.u32 %s21, 1
        %s225 = scalar_lea.sflag [#allocation7], %s224
        %s226 = sand.u32 %s69, 1
        %s227 = smul.addr %s226, 8
        %s228 = scalar_lea.vmem [#allocation6], %s227
        // Predicated region
        $region37: #{tpu_custom_call.1} parent=31 // pred_check
          %p229 = pneg %p82
        $region38: #{tpu_custom_call.1} parent=31 // pred_check_branch
          %231 = sbr.rel (%p229) target = $region40
        $region39: #{tpu_custom_call.1} parent=31 // pred_region
          %232 = dma.done %s225, 128
        $region40: #{tpu_custom_call.1} parent=31 // pred_fallthru
          _
        %s233 = sand.u32 %s21, 1
        %s234 = scalar_lea.sflag [#allocation7], %s233
        %s235 = sand.u32 %s95, 1
        %s236 = smul.addr %s235, 48
        %s237 = scalar_lea.vmem [#allocation8], %s236
        // Predicated region
        $region41: #{tpu_custom_call.1} parent=31 // pred_check
          %p238 = pneg %p108
        $region42: #{tpu_custom_call.1} parent=31 // pred_check_branch
          %240 = sbr.rel (%p238) target = $region44
        $region43: #{tpu_custom_call.1} parent=31 // pred_region
          %241 = dma.done %s234, 768
        $region44: #{tpu_custom_call.1} parent=31 // pred_fallthru
          _
        %p242 = pneg %p54
        %p243 = pneg %p51
        %s244 = sand.u32 %s21, 1
        %s245 = scalar_lea.sflag [#allocation7], %s244
        %s246 = sand.u32 %s69, 1
        %s247 = smul.addr %s246, 8
        %s248 = scalar_lea.vmem [#allocation6], %s247
        %p249 = pneg %p82
        %p250 = pneg %p79
        %s251 = sand.u32 %s21, 1
        %s252 = scalar_lea.sflag [#allocation7], %s251
        %s253 = sand.u32 %s95, 1
        %s254 = smul.addr %s253, 48
        %s255 = scalar_lea.vmem [#allocation8], %s254
        %p256 = pneg %p108
        %p257 = pneg %p105
        %p258 = pneg %p136
        %p259 = pneg %p133
        %s260 = sand.u32 %s123, 1
        %s261 = scalar_lea.sflag [#allocation5], %s260
        %s262 = sand.u32 %s123, 1
        %s263 = smul.addr %s262, 32
        %s264 = scalar_lea.vmem [#allocation9], %s263
        %s265 = smul.u32 2, %s26
        %v267 = vld [vmem:[%s228] sm:$0xf]
        %v268 = vld [vmem:[%s228 + $0x4] sm:$0xf]
        %v269 = vld [vmem:[#allocation3] sm:$0xf]
        %v270 = vld [vmem:[#allocation3 + $0x4] sm:$0xf]
        %v271 = vmul.bf16 %v269, %v267
        %v272 = vmul.bf16 %v270, %v268
        %v273 = vld [vmem:[%s237] sm:$0xff]
        %v274 = vld [vmem:[%s237 + $0x8] sm:$0xff]
        %v277 = vunpack.c.l.b16 %v271
        %v278 = vunpack.c.l.b16 %v272
        %v279 = vpack.c.b16 %v278, %v277
        %281 = vxpose.xlu0.c.b16.start [1/8] %v279, 128
        %282 = vxpose.xlu0.c.b16.cont [2/8] 0, 128
        %283 = vxpose.xlu0.c.b16.cont [3/8] 0, 128
        %284 = vxpose.xlu0.c.b16.cont [4/8] 0, 128
        %285 = vxpose.xlu0.c.b16.cont [5/8] 0, 128
        %286 = vxpose.xlu0.c.b16.cont [6/8] 0, 128
        %287 = vxpose.xlu0.c.b16.cont [7/8] 0, 128
        %288 = vxpose.xlu0.c.b16.end [8/8] 0, 128
        %v289 = vpop.trf.xlu0
        %v290 = vpop.trf.xlu0
        %v291 = vpop.trf.xlu0
        %v292 = vpop.trf.xlu0
        %v293 = vpop.trf.xlu0
        %v294 = vpop.trf.xlu0
        %v295 = vpop.trf.xlu0
        %v296 = vpop.trf.xlu0
        %v299 = vunpack.c.l.b16 %v273
        %v300 = vunpack.c.h.b16 %v273
        %v301 = vunpack.c.l.b16 %v274
        %v302 = vunpack.c.h.b16 %v274
        %v303 = vpack.c.b16 %v301, %v299
        %v304 = vpack.c.b16 %v302, %v300
        %vm307 = vcmask 130048
        %v309 = vsel %vm307, %v289, 0
        %311 = vmatprep.subr.bf16.mxu0 %v304
        %312 = vmatpush1.bf16.msra.mxu0 %v303
        %313 = vmatprep.subr.bf16.mxu0 0
        %314 = vmatpush1.bf16.msra.mxu0 0
        %315 = vmatprep.subr.bf16.mxu0 0
        %316 = vmatpush1.bf16.msra.mxu0 0
        %317 = vmatprep.subr.bf16.mxu0 0
        %318 = vmatpush1.bf16.msra.mxu0 0
        %319 = vmatprep.subr.bf16.mxu0 0
        %320 = vmatpush1.bf16.msra.mxu0 0
        %321 = vmatprep.subr.bf16.mxu0 0
        %322 = vmatpush1.bf16.msra.mxu0 0
        %323 = vmatprep.subr.bf16.mxu0 0
        %324 = vmatpush1.bf16.msra.mxu0 0
        %325 = vmatprep.subr.bf16.mxu0 0
        %326 = vmatpush1.bf16.msra.mxu0 0
        %327 = vmatprep.subr.bf16.mxu0 0
        %328 = vmatpush1.bf16.msra.mxu0 0
        %329 = vmatprep.subr.bf16.mxu0 0
        %330 = vmatpush1.bf16.msra.mxu0 0
        %331 = vmatprep.subr.bf16.mxu0 0
        %332 = vmatpush1.bf16.msra.mxu0 0
        %333 = vmatprep.subr.bf16.mxu0 0
        %334 = vmatpush1.bf16.msra.mxu0 0
        %335 = vmatprep.subr.bf16.mxu0 0
        %336 = vmatpush1.bf16.msra.mxu0 0
        %337 = vmatprep.subr.bf16.mxu0 0
        %338 = vmatpush1.bf16.msra.mxu0 0
        %339 = vmatprep.subr.bf16.mxu0 0
        %340 = vmatpush1.bf16.msra.mxu0 0
        %341 = vmatprep.subr.bf16.mxu0 0
        %342 = vmatpush1.bf16.msra.mxu0 0
        %343 = vmatprep.mubr.bf16.mxu0 0
        %344 = vmatmul.mubr.bf16.gmra.mrb[0].mxu0 %v309
        %v345 = vpop.f32.mrb[0].mxu0
        %v346 = vadd.f32 0.0, %v345
        %v347 = vpop.f32.mrb[0].mxu0
        %v348 = vadd.f32 0.0, %v347
        %v349 = vpop.f32.mrb[0].mxu0
        %v350 = vadd.f32 0.0, %v349
        %v351 = vpop.f32.mrb[0].mxu0
        %v352 = vadd.f32 0.0, %v351
        %353 = vdwg.mxu0
        %354 = vst [vmem:[#allocation2] sm:$0xff] %v346
        %355 = vst [vmem:[#allocation2 + $0x8] sm:$0xff] %v348
        %356 = vst [vmem:[#allocation2 + $0x10] sm:$0xff] %v350
        %357 = vst [vmem:[#allocation2 + $0x18] sm:$0xff] %v352
        %s358 = scalar_lea.vmem [#allocation3], 8
        %v359 = vld [vmem:[%s358] sm:$0xf]
        %v360 = vld [vmem:[%s358 + $0x4] sm:$0xf]
        %v361 = vmul.bf16 %v359, %v267
        %v362 = vmul.bf16 %v360, %v268
        %s363 = scalar_lea.vmem %s237, 16 [#allocation8]
        %v364 = vld [vmem:[%s363] sm:$0xff]
        %v365 = vld [vmem:[%s363 + $0x8] sm:$0xff]
        %v368 = vunpack.c.l.b16 %v361
        %v369 = vunpack.c.l.b16 %v362
        %v370 = vpack.c.b16 %v369, %v368
        %372 = vxpose.xlu0.c.b16.start [1/8] %v370, 128
        %373 = vxpose.xlu0.c.b16.cont [2/8] 0, 128
        %374 = vxpose.xlu0.c.b16.cont [3/8] 0, 128
        %375 = vxpose.xlu0.c.b16.cont [4/8] 0, 128
        %376 = vxpose.xlu0.c.b16.cont [5/8] 0, 128
        %377 = vxpose.xlu0.c.b16.cont [6/8] 0, 128
        %378 = vxpose.xlu0.c.b16.cont [7/8] 0, 128
        %379 = vxpose.xlu0.c.b16.end [8/8] 0, 128
        %v380 = vpop.trf.xlu0
        %v381 = vpop.trf.xlu0
        %v382 = vpop.trf.xlu0
        %v383 = vpop.trf.xlu0
        %v384 = vpop.trf.xlu0
        %v385 = vpop.trf.xlu0
        %v386 = vpop.trf.xlu0
        %v387 = vpop.trf.xlu0
        %v390 = vunpack.c.l.b16 %v364
        %v391 = vunpack.c.h.b16 %v364
        %v392 = vunpack.c.l.b16 %v365
        %v393 = vunpack.c.h.b16 %v365
        %v394 = vpack.c.b16 %v392, %v390
        %v395 = vpack.c.b16 %v393, %v391
        %v399 = vsel %vm307, %v380, 0
        %401 = vmatprep.subr.bf16.mxu0 %v395
        %402 = vmatpush1.bf16.msra.mxu0 %v394
        %403 = vmatprep.subr.bf16.mxu0 0
        %404 = vmatpush1.bf16.msra.mxu0 0
        %405 = vmatprep.subr.bf16.mxu0 0
        %406 = vmatpush1.bf16.msra.mxu0 0
        %407 = vmatprep.subr.bf16.mxu0 0
        %408 = vmatpush1.bf16.msra.mxu0 0
        %409 = vmatprep.subr.bf16.mxu0 0
        %410 = vmatpush1.bf16.msra.mxu0 0
        %411 = vmatprep.subr.bf16.mxu0 0
        %412 = vmatpush1.bf16.msra.mxu0 0
        %413 = vmatprep.subr.bf16.mxu0 0
        %414 = vmatpush1.bf16.msra.mxu0 0
        %415 = vmatprep.subr.bf16.mxu0 0
        %416 = vmatpush1.bf16.msra.mxu0 0
        %417 = vmatprep.subr.bf16.mxu0 0
        %418 = vmatpush1.bf16.msra.mxu0 0
        %419 = vmatprep.subr.bf16.mxu0 0
        %420 = vmatpush1.bf16.msra.mxu0 0
        %421 = vmatprep.subr.bf16.mxu0 0
        %422 = vmatpush1.bf16.msra.mxu0 0
        %423 = vmatprep.subr.bf16.mxu0 0
        %424 = vmatpush1.bf16.msra.mxu0 0
        %425 = vmatprep.subr.bf16.mxu0 0
        %426 = vmatpush1.bf16.msra.mxu0 0
        %427 = vmatprep.subr.bf16.mxu0 0
        %428 = vmatpush1.bf16.msra.mxu0 0
        %429 = vmatprep.subr.bf16.mxu0 0
        %430 = vmatpush1.bf16.msra.mxu0 0
        %431 = vmatprep.subr.bf16.mxu0 0
        %432 = vmatpush1.bf16.msra.mxu0 0
        %433 = vmatprep.mubr.bf16.mxu0 0
        %434 = vmatmul.mubr.bf16.gmra.mrb[0].mxu0 %v399
        %v435 = vpop.f32.mrb[0].mxu0
        %v436 = vadd.f32 0.0, %v435
        %v437 = vpop.f32.mrb[0].mxu0
        %v438 = vadd.f32 0.0, %v437
        %v439 = vpop.f32.mrb[0].mxu0
        %v440 = vadd.f32 0.0, %v439
        %v441 = vpop.f32.mrb[0].mxu0
        %v442 = vadd.f32 0.0, %v441
        %443 = vdwg.mxu0
        %v444 = vld [vmem:[#allocation2] sm:$0xff]
        %v445 = vld [vmem:[#allocation2 + $0x8] sm:$0xff]
        %v446 = vld [vmem:[#allocation2 + $0x10] sm:$0xff]
        %v447 = vld [vmem:[#allocation2 + $0x18] sm:$0xff]
        %v448 = vadd.f32 %v444, %v436
        %v449 = vadd.f32 %v445, %v438
        %v450 = vadd.f32 %v446, %v440
        %v451 = vadd.f32 %v447, %v442
        %452 = vst [vmem:[#allocation2] sm:$0xff] %v448
        %453 = vst [vmem:[#allocation2 + $0x8] sm:$0xff] %v449
        %454 = vst [vmem:[#allocation2 + $0x10] sm:$0xff] %v450
        %455 = vst [vmem:[#allocation2 + $0x18] sm:$0xff] %v451
        %s456 = scalar_lea.vmem [#allocation3], 16
        %v457 = vld [vmem:[%s456] sm:$0xf]
        %v458 = vld [vmem:[%s456 + $0x4] sm:$0xf]
        %v459 = vmul.bf16 %v457, %v267
        %v460 = vmul.bf16 %v458, %v268
        %s461 = scalar_lea.vmem %s237, 32 [#allocation8]
        %v462 = vld [vmem:[%s461] sm:$0xff]
        %v463 = vld [vmem:[%s461 + $0x8] sm:$0xff]
        %v466 = vunpack.c.l.b16 %v459
        %v467 = vunpack.c.l.b16 %v460
        %v468 = vpack.c.b16 %v467, %v466
        %470 = vxpose.xlu0.c.b16.start [1/8] %v468, 128
        %471 = vxpose.xlu0.c.b16.cont [2/8] 0, 128
        %472 = vxpose.xlu0.c.b16.cont [3/8] 0, 128
        %473 = vxpose.xlu0.c.b16.cont [4/8] 0, 128
        %474 = vxpose.xlu0.c.b16.cont [5/8] 0, 128
        %475 = vxpose.xlu0.c.b16.cont [6/8] 0, 128
        %476 = vxpose.xlu0.c.b16.cont [7/8] 0, 128
        %477 = vxpose.xlu0.c.b16.end [8/8] 0, 128
        %v478 = vpop.trf.xlu0
        %v479 = vpop.trf.xlu0
        %v480 = vpop.trf.xlu0
        %v481 = vpop.trf.xlu0
        %v482 = vpop.trf.xlu0
        %v483 = vpop.trf.xlu0
        %v484 = vpop.trf.xlu0
        %v485 = vpop.trf.xlu0
        %v488 = vunpack.c.l.b16 %v462
        %v489 = vunpack.c.h.b16 %v462
        %v490 = vunpack.c.l.b16 %v463
        %v491 = vunpack.c.h.b16 %v463
        %v492 = vpack.c.b16 %v490, %v488
        %v493 = vpack.c.b16 %v491, %v489
        %v497 = vsel %vm307, %v478, 0
        %499 = vmatprep.subr.bf16.mxu0 %v493
        %500 = vmatpush1.bf16.msra.mxu0 %v492
        %501 = vmatprep.subr.bf16.mxu0 0
        %502 = vmatpush1.bf16.msra.mxu0 0
        %503 = vmatprep.subr.bf16.mxu0 0
        %504 = vmatpush1.bf16.msra.mxu0 0
        %505 = vmatprep.subr.bf16.mxu0 0
        %506 = vmatpush1.bf16.msra.mxu0 0
        %507 = vmatprep.subr.bf16.mxu0 0
        %508 = vmatpush1.bf16.msra.mxu0 0
        %509 = vmatprep.subr.bf16.mxu0 0
        %510 = vmatpush1.bf16.msra.mxu0 0
        %511 = vmatprep.subr.bf16.mxu0 0
        %512 = vmatpush1.bf16.msra.mxu0 0
        %513 = vmatprep.subr.bf16.mxu0 0
        %514 = vmatpush1.bf16.msra.mxu0 0
        %515 = vmatprep.subr.bf16.mxu0 0
        %516 = vmatpush1.bf16.msra.mxu0 0
        %517 = vmatprep.subr.bf16.mxu0 0
        %518 = vmatpush1.bf16.msra.mxu0 0
        %519 = vmatprep.subr.bf16.mxu0 0
        %520 = vmatpush1.bf16.msra.mxu0 0
        %521 = vmatprep.subr.bf16.mxu0 0
        %522 = vmatpush1.bf16.msra.mxu0 0
        %523 = vmatprep.subr.bf16.mxu0 0
        %524 = vmatpush1.bf16.msra.mxu0 0
        %525 = vmatprep.subr.bf16.mxu0 0
        %526 = vmatpush1.bf16.msra.mxu0 0
        %527 = vmatprep.subr.bf16.mxu0 0
        %528 = vmatpush1.bf16.msra.mxu0 0
        %529 = vmatprep.subr.bf16.mxu0 0
        %530 = vmatpush1.bf16.msra.mxu0 0
        %531 = vmatprep.mubr.bf16.mxu0 0
        %532 = vmatmul.mubr.bf16.gmra.mrb[0].mxu0 %v497
        %v533 = vpop.f32.mrb[0].mxu0
        %v534 = vadd.f32 0.0, %v533
        %v535 = vpop.f32.mrb[0].mxu0
        %v536 = vadd.f32 0.0, %v535
        %v537 = vpop.f32.mrb[0].mxu0
        %v538 = vadd.f32 0.0, %v537
        %v539 = vpop.f32.mrb[0].mxu0
        %v540 = vadd.f32 0.0, %v539
        %541 = vdwg.mxu0
        %v542 = vld [vmem:[#allocation2] sm:$0xff]
        %v543 = vld [vmem:[#allocation2 + $0x8] sm:$0xff]
        %v544 = vld [vmem:[#allocation2 + $0x10] sm:$0xff]
        %v545 = vld [vmem:[#allocation2 + $0x18] sm:$0xff]
        %v546 = vadd.f32 %v542, %v534
        %v547 = vadd.f32 %v543, %v536
        %v548 = vadd.f32 %v544, %v538
        %v549 = vadd.f32 %v545, %v540
        %550 = vst [vmem:[#allocation2] sm:$0xff] %v546
        %551 = vst [vmem:[#allocation2 + $0x8] sm:$0xff] %v547
        %552 = vst [vmem:[#allocation2 + $0x10] sm:$0xff] %v548
        %553 = vst [vmem:[#allocation2 + $0x18] sm:$0xff] %v549
        %v554 = vld [vmem:[#allocation2] sm:$0xff]
        %v555 = vld [vmem:[#allocation2 + $0x8] sm:$0xff]
        %v556 = vld [vmem:[#allocation2 + $0x10] sm:$0xff]
        %v557 = vld [vmem:[#allocation2 + $0x18] sm:$0xff]
        %v558 = vmax.f32 %v554, 0.0
        %v559 = vmax.f32 %v555, 0.0
        %v560 = vmax.f32 %v556, 0.0
        %v561 = vmax.f32 %v557, 0.0
        %562 = vst [vmem:[%s264] sm:$0xff] %v558
        %563 = vst [vmem:[%s264 + $0x8] sm:$0xff] %v559
        %564 = vst [vmem:[%s264 + $0x10] sm:$0xff] %v560
        %565 = vst [vmem:[%s264 + $0x18] sm:$0xff] %v561
        %s566 = sand.u32 %s123, 1
        %s567 = scalar_lea.sflag [#allocation5], %s566
        %s568 = sand.u32 %s123, 1
        %s569 = smul.addr %s568, 32
        %s570 = scalar_lea.vmem [#allocation9], %s569
        // Predicated region
        $region45: #{tpu_custom_call.1} parent=31 // pred_check
          %p571 = pneg %p133
        $region46: #{tpu_custom_call.1} parent=31 // pred_check_branch
          %573 = sbr.rel (%p571) target = $region48
        $region47: #{tpu_custom_call.1} parent=31 // pred_region
          %s574 = smul.u32 2, %s26
          %s576 = ssub.s32 512, 512
          %577 = vsyncadd %s567, %s576
          %s578 = smul.addr %s574, 2
          %s579 = smul.addr %s25, 4
          %s580 = sadd.s32 %s578, %s579
          %s581 = smul.addr %s580, 128
          %s582 = scalar_lea.hbm %s3, %s581
          %s583 = sshll.u32 %s570, 4
          %s584 = int_to_ptr.vmem [resolvable:$true] %s583
          %589 = dma.vmem_to_hbm [thread:$0]  %s584, 512, %s582, %s567, 256, 256, 16
        $region48: #{tpu_custom_call.1} parent=31 // pred_fallthru
          _
      $region32: #{tpu_custom_call.1} parent=5 // pred_fallthru
        _
      %p590 = scmp.le.s32.totalorder 2, %s16
      // Predicated region
      $region49: #{tpu_custom_call.1} parent=5 // pred_check
        %p591 = pneg %p590
      $region50: #{tpu_custom_call.1} parent=5 // pred_check_branch
        %593 = sbr.rel (%p591) target = $region52
      $region51: #{tpu_custom_call.1} parent=5 // pred_region
        %s594 = ssub.s32 %s16, 2
        // Predicated region
        $region53: #{tpu_custom_call.1} parent=51 // pred_check
          %p595 = pneg %p139
        $region54: #{tpu_custom_call.1} parent=51 // pred_check_branch
          %597 = sbr.rel (%p595) target = $region56
        $region55: #{tpu_custom_call.1} parent=51 // pred_region
          %s598 = sand.u32 %s124, 1
          %s599 = scalar_lea.sflag [#allocation5], %s598
          %s600 = sand.u32 %s124, 1
          %s601 = smul.addr %s600, 32
          %s602 = scalar_lea.vmem [#allocation9], %s601
          %603 = dma.done %s599, 512
        $region56: #{tpu_custom_call.1} parent=51 // pred_fallthru
          _
      $region52: #{tpu_custom_call.1} parent=5 // pred_fallthru
        _
    $region6: #{tpu_custom_call.1} parent=1 // loop_footer
      %s20 = sadd.s32 1, %s16
    $region7: #{tpu_custom_call.1} parent=1 // loop_footer_branch
      %15 = sbr.rel target = $region3
    $region8: #{tpu_custom_call.1} parent=1 // loop_exit
      _
    %604 = vsyncpa [#allocation4], 1
    %s605 = scalar_lea.sflag [#allocation4], 1
    %606 = vsyncpa %s605, 1
    %607 = vsyncpa [#allocation7], 1
    %s608 = scalar_lea.sflag [#allocation7], 1
    %609 = vsyncpa %s608, 1
    %610 = vsyncpa [#allocation5], 1
    %s611 = scalar_lea.sflag [#allocation5], 1
    %612 = vsyncpa %s611, 1

</llo_original>
